<compile_context>
chip_gen: v7x
topology: tpu7x:2x2x1
jax: 0.10.0
libtpu: 0.0.40
codegen_flags: <defaults>
</compile_context>

<pallas_src>
import jax
import jax.numpy as jnp
from jax.experimental import pallas as pl
from jax.experimental.pallas import tpu as pltpu


DEFAULT_TILE_B = 512  # batch rows (lanes) per grid step


def _log_sigmoid(x):
    # Numerically stable log(sigmoid(x)) = min(x, 0) - log1p(exp(-|x|))
    return jnp.minimum(x, 0.0) - jnp.log1p(jnp.exp(-jnp.abs(x)))


def _neg_sampling_kernel(c_ref, t_ref, n_ref, out_ref):
    """One batch tile.

    c_ref : (E, TB)     center embeddings  (batch on lanes)
    t_ref : (E, TB)     target embeddings
    n_ref : (K, E, TB)  negative embeddings
    out_ref: (1, TB)    per-row loss (positive sign; negated + averaged in JAX)
    """
    k = n_ref.shape[0]

    center = c_ref[...].astype(jnp.float32)            # (E, TB)
    target = t_ref[...].astype(jnp.float32)            # (E, TB)

    pos_score = jnp.sum(target * center, axis=0, keepdims=True)        # (1, TB)
    loss = _log_sigmoid(pos_score)

    # Static loop over K=5: each iteration is a fully lane-dense (E, TB)
    # multiply + sublane reduce; avoids the (TB, K, E) broadcast / spills.
    for j in range(k):
        neg_j = n_ref[j].astype(jnp.float32)                           # (E, TB)
        neg_score = -jnp.sum(neg_j * center, axis=0, keepdims=True)    # (1, TB)
        loss = loss + _log_sigmoid(neg_score)

    out_ref[...] = loss                                                # (1, TB)


def negative_sampling_loss(emb_u, emb_v, center_words, target_words,
                           negative_words, *, tile_b=DEFAULT_TILE_B):
    """Forward pass identical to NegativeSampling.forward (returns scalar loss)."""
    B, K = negative_words.shape
    V, E = emb_u.shape

    # Clamp the tile to the (128-aligned) batch so tiny demos don't over-pad,
    # while production batches get the larger 512-lane tiles.
    b_aligned = ((B + 127) // 128) * 128
    tile_b = max(128, min(tile_b, b_aligned))
    num_tiles = pl.cdiv(B, tile_b)
    b_pad = num_tiles * tile_b
    pad = b_pad - B

    # ---- wrapper-side gather (coalesced XLA gather, fuses with transpose) ---
    c_idx = center_words.reshape(-1)
    t_idx = target_words.reshape(-1)

    c_emb = jnp.pad(emb_v[c_idx], ((0, pad), (0, 0)))          # (b_pad, E)
    t_emb = jnp.pad(emb_u[t_idx], ((0, pad), (0, 0)))          # (b_pad, E)
    n_emb = jnp.pad(emb_u[negative_words],
                    ((0, pad), (0, 0), (0, 0)))                # (b_pad, K, E)

    # Lane-dense layout: batch on the last (lane) axis.
    c_t = c_emb.T                                              # (E, b_pad)
    t_t = t_emb.T                                              # (E, b_pad)
    n_t = jnp.transpose(n_emb, (1, 2, 0))                      # (K, E, b_pad)

    itemsize = jnp.dtype(emb_u.dtype).itemsize
    cost = pl.CostEstimate(
        flops=2 * b_pad * (K + 1) * E,
        transcendentals=2 * b_pad * (K + 1),          # exp + log per score
        bytes_accessed=(K + 2) * b_pad * E * itemsize + b_pad * 4,
    )

    per_row = pl.pallas_call(
        _neg_sampling_kernel,
        out_shape=jax.ShapeDtypeStruct((num_tiles, tile_b), jnp.float32),
        grid=(num_tiles,),
        in_specs=[
            pl.BlockSpec((E, tile_b), lambda i: (0, i)),
            pl.BlockSpec((E, tile_b), lambda i: (0, i)),
            pl.BlockSpec((K, E, tile_b), lambda i: (0, 0, i)),
        ],
        out_specs=pl.BlockSpec((1, tile_b), lambda i: (i, 0)),
        compiler_params=pltpu.CompilerParams(
            dimension_semantics=("parallel",),
        ),
        cost_estimate=cost,
    )(c_t, t_t, n_t)

    # Mean over the TRUE batch size (padded rows sliced away) in JAX.
    return -jnp.mean(per_row.reshape(-1)[:B])


def reference_loss(emb_u, emb_v, center_words, target_words, negative_words):
    """Pure-JAX reference mirroring the PyTorch module line-by-line."""
    center_embs = emb_v[center_words].astype(jnp.float32)   # (B, 1, E)
    target_embs = emb_u[target_words].astype(jnp.float32)   # (B, 1, E)
    neg_embs = emb_u[negative_words].astype(jnp.float32)    # (B, K, E)
    pos = jnp.einsum("bme,bne->bmn", target_embs, center_embs)[..., 0]   # (B, 1)
    neg = -jnp.einsum("bke,bne->bkn", neg_embs, center_embs)             # (B, K, 1)
    loss = jax.nn.log_sigmoid(pos) + jnp.sum(jax.nn.log_sigmoid(neg), axis=1)
    return -jnp.mean(loss)


if __name__ == "__main__":
    vocab_size = 50
    emb_size = 32
    B = 2          # batch
    K = 5          # negative samples per center word

    key = jax.random.PRNGKey(0)
    k_u, k_v, k_c, k_t, k_n = jax.random.split(key, 5)

    # nn.Embedding default init: N(0, 1), float32 (matches the PyTorch module).
    emb_u = jax.random.normal(k_u, (vocab_size, emb_size), jnp.float32)
    emb_v = jax.random.normal(k_v, (vocab_size, emb_size), jnp.float32)

    center_words = jax.random.randint(k_c, (B, 1), 0, vocab_size, dtype=jnp.int32)
    target_words = jax.random.randint(k_t, (B, 1), 0, vocab_size, dtype=jnp.int32)
    negative_words = jax.random.randint(k_n, (B, K), 0, vocab_size, dtype=jnp.int32)

    loss = negative_sampling_loss(emb_u, emb_v, center_words, target_words,
                                  negative_words)
    loss = jax.block_until_ready(loss)

    ref = reference_loss(emb_u, emb_v, center_words, target_words, negative_words)
    assert jnp.allclose(loss, ref, rtol=1e-5, atol=1e-5), (loss, ref)

    print("KERNEL_OK")
</pallas_src>

<mosaic_0001>
module attributes {stable_mosaic.version = 11 : i64} {
  func.func @_neg_sampling_kernel(%arg0: i32, %arg1: memref<32x128xf32, #tpu.memory_space<vmem>>, %arg2: memref<32x128xf32, #tpu.memory_space<vmem>>, %arg3: memref<5x32x128xf32, #tpu.memory_space<vmem>>, %arg4: memref<1x128xf32, #tpu.memory_space<vmem>>) attributes {dimension_semantics = [#tpu.dimension_semantics<parallel>], iteration_bounds = array<i64: 1>, scalar_prefetch = 0 : i64, scratch_operands = 0 : i64, tpu.core_type = #tpu.core_type<tc>, window_params = [{transform_indices = @transform_0, window_bounds = array<i64: 32, 128>}, {transform_indices = @transform_1, window_bounds = array<i64: 32, 128>}, {transform_indices = @transform_2, window_bounds = array<i64: 5, 32, 128>}, {transform_indices = @transform_3, window_bounds = array<i64: 1, 128>}]} {
    %c0 = arith.constant 0 : index
    %c0_0 = arith.constant 0 : index
    %0 = vector.load %arg1[%c0, %c0_0] : memref<32x128xf32, #tpu.memory_space<vmem>>, vector<32x128xf32>
    %c0_1 = arith.constant 0 : index
    %c0_2 = arith.constant 0 : index
    %1 = vector.load %arg2[%c0_1, %c0_2] : memref<32x128xf32, #tpu.memory_space<vmem>>, vector<32x128xf32>
    %2 = arith.mulf %1, %0 : vector<32x128xf32>
    %cst = arith.constant dense<0.000000e+00> : vector<128xf32>
    %3 = vector.multi_reduction <add>, %2, %cst [0] : vector<32x128xf32> to vector<128xf32>
    %4 = vector.shape_cast %3 : vector<128xf32> to vector<1x128xf32>
    %cst_3 = arith.constant 0.000000e+00 : f32
    %5 = vector.broadcast %cst_3 : f32 to vector<1x128xf32>
    %6 = arith.minimumf %4, %5 : vector<1x128xf32>
    %7 = math.absf %4 : vector<1x128xf32>
    %cst_4 = arith.constant 0.000000e+00 : f32
    %8 = vector.broadcast %cst_4 : f32 to vector<1x128xf32>
    %9 = arith.subf %8, %7 : vector<1x128xf32>
    %10 = math.exp %9 : vector<1x128xf32>
    %11 = math.log1p %10 : vector<1x128xf32>
    %12 = arith.subf %6, %11 : vector<1x128xf32>
    %c0_5 = arith.constant 0 : index
    %c0_6 = arith.constant 0 : index
    %c0_7 = arith.constant 0 : index
    %13 = vector.load %arg3[%c0_5, %c0_6, %c0_7] : memref<5x32x128xf32, #tpu.memory_space<vmem>>, vector<1x32x128xf32>
    %14 = vector.shape_cast %13 : vector<1x32x128xf32> to vector<32x128xf32>
    %15 = arith.mulf %14, %0 : vector<32x128xf32>
    %cst_8 = arith.constant dense<0.000000e+00> : vector<128xf32>
    %16 = vector.multi_reduction <add>, %15, %cst_8 [0] : vector<32x128xf32> to vector<128xf32>
    %17 = vector.shape_cast %16 : vector<128xf32> to vector<1x128xf32>
    %cst_9 = arith.constant 0.000000e+00 : f32
    %18 = vector.broadcast %cst_9 : f32 to vector<1x128xf32>
    %19 = arith.subf %18, %17 : vector<1x128xf32>
    %cst_10 = arith.constant 0.000000e+00 : f32
    %20 = vector.broadcast %cst_10 : f32 to vector<1x128xf32>
    %21 = arith.minimumf %19, %20 : vector<1x128xf32>
    %22 = math.absf %19 : vector<1x128xf32>
    %cst_11 = arith.constant 0.000000e+00 : f32
    %23 = vector.broadcast %cst_11 : f32 to vector<1x128xf32>
    %24 = arith.subf %23, %22 : vector<1x128xf32>
    %25 = math.exp %24 : vector<1x128xf32>
    %26 = math.log1p %25 : vector<1x128xf32>
    %27 = arith.subf %21, %26 : vector<1x128xf32>
    %28 = arith.addf %12, %27 : vector<1x128xf32>
    %c1 = arith.constant 1 : index
    %c0_12 = arith.constant 0 : index
    %c0_13 = arith.constant 0 : index
    %29 = vector.load %arg3[%c1, %c0_12, %c0_13] : memref<5x32x128xf32, #tpu.memory_space<vmem>>, vector<1x32x128xf32>
    %30 = vector.shape_cast %29 : vector<1x32x128xf32> to vector<32x128xf32>
    %31 = arith.mulf %30, %0 : vector<32x128xf32>
    %cst_14 = arith.constant dense<0.000000e+00> : vector<128xf32>
    %32 = vector.multi_reduction <add>, %31, %cst_14 [0] : vector<32x128xf32> to vector<128xf32>
    %33 = vector.shape_cast %32 : vector<128xf32> to vector<1x128xf32>
    %cst_15 = arith.constant 0.000000e+00 : f32
    %34 = vector.broadcast %cst_15 : f32 to vector<1x128xf32>
    %35 = arith.subf %34, %33 : vector<1x128xf32>
    %cst_16 = arith.constant 0.000000e+00 : f32
    %36 = vector.broadcast %cst_16 : f32 to vector<1x128xf32>
    %37 = arith.minimumf %35, %36 : vector<1x128xf32>
    %38 = math.absf %35 : vector<1x128xf32>
    %cst_17 = arith.constant 0.000000e+00 : f32
    %39 = vector.broadcast %cst_17 : f32 to vector<1x128xf32>
    %40 = arith.subf %39, %38 : vector<1x128xf32>
    %41 = math.exp %40 : vector<1x128xf32>
    %42 = math.log1p %41 : vector<1x128xf32>
    %43 = arith.subf %37, %42 : vector<1x128xf32>
    %44 = arith.addf %28, %43 : vector<1x128xf32>
    %c2 = arith.constant 2 : index
    %c0_18 = arith.constant 0 : index
    %c0_19 = arith.constant 0 : index
    %45 = vector.load %arg3[%c2, %c0_18, %c0_19] : memref<5x32x128xf32, #tpu.memory_space<vmem>>, vector<1x32x128xf32>
    %46 = vector.shape_cast %45 : vector<1x32x128xf32> to vector<32x128xf32>
    %47 = arith.mulf %46, %0 : vector<32x128xf32>
    %cst_20 = arith.constant dense<0.000000e+00> : vector<128xf32>
    %48 = vector.multi_reduction <add>, %47, %cst_20 [0] : vector<32x128xf32> to vector<128xf32>
    %49 = vector.shape_cast %48 : vector<128xf32> to vector<1x128xf32>
    %cst_21 = arith.constant 0.000000e+00 : f32
    %50 = vector.broadcast %cst_21 : f32 to vector<1x128xf32>
    %51 = arith.subf %50, %49 : vector<1x128xf32>
    %cst_22 = arith.constant 0.000000e+00 : f32
    %52 = vector.broadcast %cst_22 : f32 to vector<1x128xf32>
    %53 = arith.minimumf %51, %52 : vector<1x128xf32>
    %54 = math.absf %51 : vector<1x128xf32>
    %cst_23 = arith.constant 0.000000e+00 : f32
    %55 = vector.broadcast %cst_23 : f32 to vector<1x128xf32>
    %56 = arith.subf %55, %54 : vector<1x128xf32>
    %57 = math.exp %56 : vector<1x128xf32>
    %58 = math.log1p %57 : vector<1x128xf32>
    %59 = arith.subf %53, %58 : vector<1x128xf32>
    %60 = arith.addf %44, %59 : vector<1x128xf32>
    %c3 = arith.constant 3 : index
    %c0_24 = arith.constant 0 : index
    %c0_25 = arith.constant 0 : index
    %61 = vector.load %arg3[%c3, %c0_24, %c0_25] : memref<5x32x128xf32, #tpu.memory_space<vmem>>, vector<1x32x128xf32>
    %62 = vector.shape_cast %61 : vector<1x32x128xf32> to vector<32x128xf32>
    %63 = arith.mulf %62, %0 : vector<32x128xf32>
    %cst_26 = arith.constant dense<0.000000e+00> : vector<128xf32>
    %64 = vector.multi_reduction <add>, %63, %cst_26 [0] : vector<32x128xf32> to vector<128xf32>
    %65 = vector.shape_cast %64 : vector<128xf32> to vector<1x128xf32>
    %cst_27 = arith.constant 0.000000e+00 : f32
    %66 = vector.broadcast %cst_27 : f32 to vector<1x128xf32>
    %67 = arith.subf %66, %65 : vector<1x128xf32>
    %cst_28 = arith.constant 0.000000e+00 : f32
    %68 = vector.broadcast %cst_28 : f32 to vector<1x128xf32>
    %69 = arith.minimumf %67, %68 : vector<1x128xf32>
    %70 = math.absf %67 : vector<1x128xf32>
    %cst_29 = arith.constant 0.000000e+00 : f32
    %71 = vector.broadcast %cst_29 : f32 to vector<1x128xf32>
    %72 = arith.subf %71, %70 : vector<1x128xf32>
    %73 = math.exp %72 : vector<1x128xf32>
    %74 = math.log1p %73 : vector<1x128xf32>
    %75 = arith.subf %69, %74 : vector<1x128xf32>
    %76 = arith.addf %60, %75 : vector<1x128xf32>
    %c4 = arith.constant 4 : index
    %c0_30 = arith.constant 0 : index
    %c0_31 = arith.constant 0 : index
    %77 = vector.load %arg3[%c4, %c0_30, %c0_31] : memref<5x32x128xf32, #tpu.memory_space<vmem>>, vector<1x32x128xf32>
    %78 = vector.shape_cast %77 : vector<1x32x128xf32> to vector<32x128xf32>
    %79 = arith.mulf %78, %0 : vector<32x128xf32>
    %cst_32 = arith.constant dense<0.000000e+00> : vector<128xf32>
    %80 = vector.multi_reduction <add>, %79, %cst_32 [0] : vector<32x128xf32> to vector<128xf32>
    %81 = vector.shape_cast %80 : vector<128xf32> to vector<1x128xf32>
    %cst_33 = arith.constant 0.000000e+00 : f32
    %82 = vector.broadcast %cst_33 : f32 to vector<1x128xf32>
    %83 = arith.subf %82, %81 : vector<1x128xf32>
    %cst_34 = arith.constant 0.000000e+00 : f32
    %84 = vector.broadcast %cst_34 : f32 to vector<1x128xf32>
    %85 = arith.minimumf %83, %84 : vector<1x128xf32>
    %86 = math.absf %83 : vector<1x128xf32>
    %cst_35 = arith.constant 0.000000e+00 : f32
    %87 = vector.broadcast %cst_35 : f32 to vector<1x128xf32>
    %88 = arith.subf %87, %86 : vector<1x128xf32>
    %89 = math.exp %88 : vector<1x128xf32>
    %90 = math.log1p %89 : vector<1x128xf32>
    %91 = arith.subf %85, %90 : vector<1x128xf32>
    %92 = arith.addf %76, %91 : vector<1x128xf32>
    %c0_36 = arith.constant 0 : index
    %c0_37 = arith.constant 0 : index
    %93 = vector.load %arg4[%c0_36, %c0_37] : memref<1x128xf32, #tpu.memory_space<vmem>>, vector<1x128xf32>
    tpu.vector_store %arg4[%c0_36, %c0_37], %92 {strides = array<i32>} : memref<1x128xf32, #tpu.memory_space<vmem>>, vector<1x128xf32>,
    return
  }
  func.func @transform_0(%arg0: i32) -> (i32, i32) {
    %c0_i32 = arith.constant 0 : i32
    %c0_i32_0 = arith.constant 0 : i32
    return %c0_i32, %arg0 : i32, i32
  }
  func.func @transform_1(%arg0: i32) -> (i32, i32) {
    %c0_i32 = arith.constant 0 : i32
    %c0_i32_0 = arith.constant 0 : i32
    return %c0_i32, %arg0 : i32, i32
  }
  func.func @transform_2(%arg0: i32) -> (i32, i32, i32) {
    %c0_i32 = arith.constant 0 : i32
    %c0_i32_0 = arith.constant 0 : i32
    %c0_i32_1 = arith.constant 0 : i32
    return %c0_i32, %c0_i32_0, %arg0 : i32, i32, i32
  }
  func.func @transform_3(%arg0: i32) -> (i32, i32) {
    %c0_i32 = arith.constant 0 : i32
    %c0_i32_0 = arith.constant 0 : i32
    return %arg0, %c0_i32 : i32, i32
  }
}

</mosaic_0001>

<llo_original>
// kernel: tpu_custom_call.1
$region0: #{tpu_custom_call.1}
  #allocation0 [shape = 'u32[]', space=smem, size = 0x4, offset = 0x4, fixed_abs, tag = 'smem constant byte address 0x4 - core index']
  #allocation1 [shape = 'u32[144,128]{1,0:T(1,128)}', space=vmem, size = 0x12000, scoped, tag = 'internal scratch']
  %s0 = inlined_call_operand.hbm [shape: f32[32,128], index: 0, kind: input, shape index: {}]
  %s1 = inlined_call_operand.hbm [shape: f32[32,128], index: 1, kind: input, shape index: {}]
  %s2 = inlined_call_operand.hbm [shape: f32[5,32,128], index: 2, kind: input, shape index: {}]
  %s3 = inlined_call_operand.hbm [shape: f32[1,128], index: 3, kind: output, shape index: {}]
  %s4 = sld [smem:[#allocation0]]
  $region34: #{tpu_custom_call.1} parent=0
    _
  %s6 = ssub.s32 1, %s4
  %s7 = scalar_select 0, %s6, %s4
  $region1: #{tpu_custom_call.1} parent=0
    #allocation2 [shape = 'u8[16384]{0}', space=vmem, size = 0x4000, scoped, tag = 'input window, operand 0, single buffered']
    #allocation3 [shape = 's32[1]{0}', space=sflag, size = 0x4, scoped, tag = 'scoped memory for tpu_custom_call.1']
    #allocation4 [shape = 's32[1]{0}', space=sflag, size = 0x4, scoped, tag = 'scoped memory for tpu_custom_call.1']
    #allocation5 [shape = 'u8[16384]{0}', space=vmem, size = 0x4000, scoped, tag = 'input window, operand 1, single buffered']
    #allocation6 [shape = 's32[1]{0}', space=sflag, size = 0x4, scoped, tag = 'scoped memory for tpu_custom_call.1']
    #allocation7 [shape = 'u8[81920]{0}', space=vmem, size = 0x14000, scoped, tag = 'input window, operand 2, single buffered']
    #allocation8 [shape = 'u8[512]{0}', space=vmem, size = 0x400, scoped, tag = 'output window, operand 0, single buffered']
    %8 = vsyncpa [#allocation3], 0
    %9 = vsyncpa [#allocation6], 0
    %10 = vsyncpa [#allocation4], 0
    // Predicated region
    $region2: #{tpu_custom_call.1} parent=1 // pred_check
      _
    $region3: #{tpu_custom_call.1} parent=1 // pred_check_branch
      %12 = sbr.rel (0) target = $region5
    $region4: #{tpu_custom_call.1} parent=1 // pred_region
      %s14 = ssub.s32 512, 512
      %15 = vsyncadd [#allocation3], %s14
      %s16 = sshll.u32 [#allocation2], 4
      %s17 = int_to_ptr.vmem [resolvable:$true] %s16
      %22 = dma.hbm_to_vmem [thread:$0]  %s0, 512, %s17, [#allocation3], 128, 128, 8
    $region5: #{tpu_custom_call.1} parent=1 // pred_fallthru
      _
    // Predicated region
    $region6: #{tpu_custom_call.1} parent=1 // pred_check
      _
    $region7: #{tpu_custom_call.1} parent=1 // pred_check_branch
      %24 = sbr.rel (0) target = $region9
    $region8: #{tpu_custom_call.1} parent=1 // pred_region
      %s26 = ssub.s32 512, 512
      %27 = vsyncadd [#allocation6], %s26
      %s28 = sshll.u32 [#allocation5], 4
      %s29 = int_to_ptr.vmem [resolvable:$true] %s28
      %34 = dma.hbm_to_vmem [thread:$0]  %s1, 512, %s29, [#allocation6], 128, 128, 8
    $region9: #{tpu_custom_call.1} parent=1 // pred_fallthru
      _
    // Predicated region
    $region10: #{tpu_custom_call.1} parent=1 // pred_check
      _
    $region11: #{tpu_custom_call.1} parent=1 // pred_check_branch
      %36 = sbr.rel (0) target = $region13
    $region12: #{tpu_custom_call.1} parent=1 // pred_region
      %s38 = ssub.s32 2560, 2560
      %39 = vsyncadd [#allocation6], %s38
      %s40 = sshll.u32 [#allocation7], 4
      %s41 = int_to_ptr.vmem [resolvable:$true] %s40
      %46 = dma.hbm_to_vmem [thread:$0]  %s2, 2560, %s41, [#allocation6], 128, 128, 8
    $region13: #{tpu_custom_call.1} parent=1 // pred_fallthru
      _
    // Predicated region
    $region14: #{tpu_custom_call.1} parent=1 // pred_check
      _
    $region15: #{tpu_custom_call.1} parent=1 // pred_check_branch
      %48 = sbr.rel (0) target = $region17
    $region16: #{tpu_custom_call.1} parent=1 // pred_region
      %49 = dma.done [#allocation3], 512
    $region17: #{tpu_custom_call.1} parent=1 // pred_fallthru
      _
    // Predicated region
    $region18: #{tpu_custom_call.1} parent=1 // pred_check
      _
    $region19: #{tpu_custom_call.1} parent=1 // pred_check_branch
      %51 = sbr.rel (0) target = $region21
    $region20: #{tpu_custom_call.1} parent=1 // pred_region
      %52 = dma.done [#allocation6], 512
    $region21: #{tpu_custom_call.1} parent=1 // pred_fallthru
      _
    // Predicated region
    $region22: #{tpu_custom_call.1} parent=1 // pred_check
      _
    $region23: #{tpu_custom_call.1} parent=1 // pred_check_branch
      %54 = sbr.rel (0) target = $region25
    $region24: #{tpu_custom_call.1} parent=1 // pred_region
      %55 = dma.done [#allocation6], 2560
    $region25: #{tpu_custom_call.1} parent=1 // pred_fallthru
      _
    %v56 = vld [vmem:[#allocation2] sm:$0xff]
    %v57 = vld [vmem:[#allocation2 + $0x8] sm:$0xff]
    %v58 = vld [vmem:[#allocation2 + $0x10] sm:$0xff]
    %v59 = vld [vmem:[#allocation2 + $0x18] sm:$0xff]
    %v60 = vld [vmem:[#allocation5] sm:$0xff]
    %v61 = vld [vmem:[#allocation5 + $0x8] sm:$0xff]
    %v62 = vld [vmem:[#allocation5 + $0x10] sm:$0xff]
    %v63 = vld [vmem:[#allocation5 + $0x18] sm:$0xff]
    %v64 = vmul.f32 %v60, %v56
    %v65 = vmul.f32 %v61, %v57
    %v66 = vmul.f32 %v62, %v58
    %v67 = vmul.f32 %v63, %v59
    %v68 = vadd.f32 %v64, %v65
    %v69 = vadd.f32 %v68, %v66
    %v70 = vadd.f32 %v69, %v67
    %v71 = vrot.slane %v70, 4
    %v72 = vadd.f32 %v70, %v71
    %v73 = vrot.slane %v72, 2
    %v74 = vadd.f32 %v72, %v73
    %v75 = vrot.slane %v74, 1
    %v76 = vadd.f32 %v74, %v75
    %v77 = vmin.f32 %v76, 0.0
    %v78 = vand.u32 2147483647, %v76
    %v79 = vsub.f32 0.0, %v78
    %v80 = vmul.f32 %v79, 1.442695
    %v81 = vpow.pop %v80
    %v82 = vadd.f32 %v81, 1.0
    %v83 = vlog2.pop %v82
    %v84 = vmul.f32 %v83, 0.6931472
    %v85 = vmul.f32 -0.5, %v81
    %v86 = vadd.f32 %v85, 1.0
    %v87 = vmul.f32 %v86, %v81
    %v88 = vand.u32 2147483647, %v81
    %vm89 = vcmp.lt.f32.partialorder %v88, 0.0004427343
    %v90 = vsel %vm89, %v87, %v84
    %v91 = vsub.f32 %v77, %v90
    %v92 = vld [vmem:[#allocation7] sm:$0xff]
    %v93 = vld [vmem:[#allocation7 + $0x8] sm:$0xff]
    %v94 = vld [vmem:[#allocation7 + $0x10] sm:$0xff]
    %v95 = vld [vmem:[#allocation7 + $0x18] sm:$0xff]
    %v96 = vmul.f32 %v92, %v56
    %v97 = vmul.f32 %v93, %v57
    %v98 = vmul.f32 %v94, %v58
    %v99 = vmul.f32 %v95, %v59
    %v100 = vadd.f32 %v96, %v97
    %v101 = vadd.f32 %v100, %v98
    %v102 = vadd.f32 %v101, %v99
    %v103 = vrot.slane %v102, 4
    %v104 = vadd.f32 %v102, %v103
    %v105 = vrot.slane %v104, 2
    %v106 = vadd.f32 %v104, %v105
    %v107 = vrot.slane %v106, 1
    %v108 = vadd.f32 %v106, %v107
    %v109 = vsub.f32 0.0, %v108
    %v110 = vmin.f32 %v109, 0.0
    %v111 = vand.u32 2147483647, %v109
    %v112 = vsub.f32 0.0, %v111
    %v113 = vmul.f32 %v112, 1.442695
    %v114 = vpow.pop %v113
    %v115 = vadd.f32 %v114, 1.0
    %v116 = vlog2.pop %v115
    %v117 = vmul.f32 %v116, 0.6931472
    %v118 = vmul.f32 -0.5, %v114
    %v119 = vadd.f32 %v118, 1.0
    %v120 = vmul.f32 %v119, %v114
    %v121 = vand.u32 2147483647, %v114
    %vm122 = vcmp.lt.f32.partialorder %v121, 0.0004427343
    %v123 = vsel %vm122, %v120, %v117
    %v124 = vsub.f32 %v110, %v123
    %v125 = vadd.f32 %v91, %v124
    %s126 = scalar_lea.vmem [#allocation7], 32
    %v127 = vld [vmem:[%s126] sm:$0xff]
    %v128 = vld [vmem:[%s126 + $0x8] sm:$0xff]
    %v129 = vld [vmem:[%s126 + $0x10] sm:$0xff]
    %v130 = vld [vmem:[%s126 + $0x18] sm:$0xff]
    %v131 = vmul.f32 %v127, %v56
    %v132 = vmul.f32 %v128, %v57
    %v133 = vmul.f32 %v129, %v58
    %v134 = vmul.f32 %v130, %v59
    %v135 = vadd.f32 %v131, %v132
    %v136 = vadd.f32 %v135, %v133
    %v137 = vadd.f32 %v136, %v134
    %v138 = vrot.slane %v137, 4
    %v139 = vadd.f32 %v137, %v138
    %v140 = vrot.slane %v139, 2
    %v141 = vadd.f32 %v139, %v140
    %v142 = vrot.slane %v141, 1
    %v143 = vadd.f32 %v141, %v142
    %v144 = vsub.f32 0.0, %v143
    %v145 = vmin.f32 %v144, 0.0
    %v146 = vand.u32 2147483647, %v144
    %v147 = vsub.f32 0.0, %v146
    %v148 = vmul.f32 %v147, 1.442695
    %v149 = vpow.pop %v148
    %v150 = vadd.f32 %v149, 1.0
    %v151 = vlog2.pop %v150
    %v152 = vmul.f32 %v151, 0.6931472
    %v153 = vmul.f32 -0.5, %v149
    %v154 = vadd.f32 %v153, 1.0
    %v155 = vmul.f32 %v154, %v149
    %v156 = vand.u32 2147483647, %v149
    %vm157 = vcmp.lt.f32.partialorder %v156, 0.0004427343
    %v158 = vsel %vm157, %v155, %v152
    %v159 = vsub.f32 %v145, %v158
    %v160 = vadd.f32 %v125, %v159
    %s161 = scalar_lea.vmem [#allocation7], 64
    %v162 = vld [vmem:[%s161] sm:$0xff]
    %v163 = vld [vmem:[%s161 + $0x8] sm:$0xff]
    %v164 = vld [vmem:[%s161 + $0x10] sm:$0xff]
    %v165 = vld [vmem:[%s161 + $0x18] sm:$0xff]
    %v166 = vmul.f32 %v162, %v56
    %v167 = vmul.f32 %v163, %v57
    %v168 = vmul.f32 %v164, %v58
    %v169 = vmul.f32 %v165, %v59
    %v170 = vadd.f32 %v166, %v167
    %v171 = vadd.f32 %v170, %v168
    %v172 = vadd.f32 %v171, %v169
    %v173 = vrot.slane %v172, 4
    %v174 = vadd.f32 %v172, %v173
    %v175 = vrot.slane %v174, 2
    %v176 = vadd.f32 %v174, %v175
    %v177 = vrot.slane %v176, 1
    %v178 = vadd.f32 %v176, %v177
    %v179 = vsub.f32 0.0, %v178
    %v180 = vmin.f32 %v179, 0.0
    %v181 = vand.u32 2147483647, %v179
    %v182 = vsub.f32 0.0, %v181
    %v183 = vmul.f32 %v182, 1.442695
    %v184 = vpow.pop %v183
    %v185 = vadd.f32 %v184, 1.0
    %v186 = vlog2.pop %v185
    %v187 = vmul.f32 %v186, 0.6931472
    %v188 = vmul.f32 -0.5, %v184
    %v189 = vadd.f32 %v188, 1.0
    %v190 = vmul.f32 %v189, %v184
    %v191 = vand.u32 2147483647, %v184
    %vm192 = vcmp.lt.f32.partialorder %v191, 0.0004427343
    %v193 = vsel %vm192, %v190, %v187
    %v194 = vsub.f32 %v180, %v193
    %v195 = vadd.f32 %v160, %v194
    %s196 = scalar_lea.vmem [#allocation7], 96
    %v197 = vld [vmem:[%s196] sm:$0xff]
    %v198 = vld [vmem:[%s196 + $0x8] sm:$0xff]
    %v199 = vld [vmem:[%s196 + $0x10] sm:$0xff]
    %v200 = vld [vmem:[%s196 + $0x18] sm:$0xff]
    %v201 = vmul.f32 %v197, %v56
    %v202 = vmul.f32 %v198, %v57
    %v203 = vmul.f32 %v199, %v58
    %v204 = vmul.f32 %v200, %v59
    %v205 = vadd.f32 %v201, %v202
    %v206 = vadd.f32 %v205, %v203
    %v207 = vadd.f32 %v206, %v204
    %v208 = vrot.slane %v207, 4
    %v209 = vadd.f32 %v207, %v208
    %v210 = vrot.slane %v209, 2
    %v211 = vadd.f32 %v209, %v210
    %v212 = vrot.slane %v211, 1
    %v213 = vadd.f32 %v211, %v212
    %v214 = vsub.f32 0.0, %v213
    %v215 = vmin.f32 %v214, 0.0
    %v216 = vand.u32 2147483647, %v214
    %v217 = vsub.f32 0.0, %v216
    %v218 = vmul.f32 %v217, 1.442695
    %v219 = vpow.pop %v218
    %v220 = vadd.f32 %v219, 1.0
    %v221 = vlog2.pop %v220
    %v222 = vmul.f32 %v221, 0.6931472
    %v223 = vmul.f32 -0.5, %v219
    %v224 = vadd.f32 %v223, 1.0
    %v225 = vmul.f32 %v224, %v219
    %v226 = vand.u32 2147483647, %v219
    %vm227 = vcmp.lt.f32.partialorder %v226, 0.0004427343
    %v228 = vsel %vm227, %v225, %v222
    %v229 = vsub.f32 %v215, %v228
    %v230 = vadd.f32 %v195, %v229
    %s231 = scalar_lea.vmem [#allocation7], 128
    %v232 = vld [vmem:[%s231] sm:$0xff]
    %v233 = vld [vmem:[%s231 + $0x8] sm:$0xff]
    %v234 = vld [vmem:[%s231 + $0x10] sm:$0xff]
    %v235 = vld [vmem:[%s231 + $0x18] sm:$0xff]
    %v236 = vmul.f32 %v232, %v56
    %v237 = vmul.f32 %v233, %v57
    %v238 = vmul.f32 %v234, %v58
    %v239 = vmul.f32 %v235, %v59
    %v240 = vadd.f32 %v236, %v237
    %v241 = vadd.f32 %v240, %v238
    %v242 = vadd.f32 %v241, %v239
    %v243 = vrot.slane %v242, 4
    %v244 = vadd.f32 %v242, %v243
    %v245 = vrot.slane %v244, 2
    %v246 = vadd.f32 %v244, %v245
    %v247 = vrot.slane %v246, 1
    %v248 = vadd.f32 %v246, %v247
    %v249 = vsub.f32 0.0, %v248
    %v250 = vmin.f32 %v249, 0.0
    %v251 = vand.u32 2147483647, %v249
    %v252 = vsub.f32 0.0, %v251
    %v253 = vmul.f32 %v252, 1.442695
    %v254 = vpow.pop %v253
    %v255 = vadd.f32 %v254, 1.0
    %v256 = vlog2.pop %v255
    %v257 = vmul.f32 %v256, 0.6931472
    %v258 = vmul.f32 -0.5, %v254
    %v259 = vadd.f32 %v258, 1.0
    %v260 = vmul.f32 %v259, %v254
    %v261 = vand.u32 2147483647, %v254
    %vm262 = vcmp.lt.f32.partialorder %v261, 0.0004427343
    %v263 = vsel %vm262, %v260, %v257
    %v264 = vsub.f32 %v250, %v263
    %v265 = vadd.f32 %v230, %v264
    %266 = vst [vmem:[#allocation8] sm:$0x1] %v265
    // Predicated region
    $region26: #{tpu_custom_call.1} parent=1 // pred_check
      _
    $region27: #{tpu_custom_call.1} parent=1 // pred_check_branch
      %268 = sbr.rel (0) target = $region29
    $region28: #{tpu_custom_call.1} parent=1 // pred_region
      %s270 = ssub.s32 16, 16
      %271 = vsyncadd [#allocation4], %s270
      %s273 = sshll.u32 [#allocation8], 4
      %s274 = int_to_ptr.vmem [resolvable:$true] %s273
      %276 = dma.vmem_to_hbm [thread:$0]  %s274, 16, %s3, [#allocation4]
    $region29: #{tpu_custom_call.1} parent=1 // pred_fallthru
      _
    // Predicated region
    $region30: #{tpu_custom_call.1} parent=1 // pred_check
      _
    $region31: #{tpu_custom_call.1} parent=1 // pred_check_branch
      %278 = sbr.rel (0) target = $region33
    $region32: #{tpu_custom_call.1} parent=1 // pred_region
      %279 = dma.done [#allocation4], 16
    $region33: #{tpu_custom_call.1} parent=1 // pred_fallthru
      _
    %280 = vsyncpa [#allocation3], 1
    %281 = vsyncpa [#allocation6], 1
    %282 = vsyncpa [#allocation4], 1

</llo_original>
